<compile_context>
chip_gen: v5e
topology: v5e:2x2
jax: 0.10.0
libtpu: 0.0.40
codegen_flags: <defaults>
</compile_context>

<pallas_src>
import functools

import jax
import jax.numpy as jnp
from jax import lax
from jax.experimental import pallas as pl
from jax.experimental.pallas import tpu as pltpu

# ---- constants mirroring mtorch/region_target_loss.py defaults ----
BBOX_DIM = 4
OBJECTNESS_DIM = 1
DEFAULT_BIASES = (1.08, 1.19, 3.42, 4.41, 6.63, 11.38, 9.42, 5.11, 16.62, 10.52)
DEFAULT_NUM_ANCHORS = 5
DEFAULT_NUM_CLASSES = 20
NO_OBJ_SC = 1.0
NUM_IMAGES_WARM = 12800
OBJ_ESC_THRESH = 0.6
OBJ_SC = 5.0
XY_SC = 1.0
WH_SC = 1.0
COORD_SC = 1.0
SEEN_IMAGES = 0          # < NUM_IMAGES_WARM  =>  warm stage is active
RESCORE = True
EPS = 1e-10


# --------------------------------------------------------------------------
# Dense kernel: sigmoid/exp + max IoU vs the valid ground truths + dense partial sums.
#   inputs  per grid block:
#     counts_ref : SMEM (num_nblocks,) int32  -- max #valid truths over this block's images
#     tru_ref    : (nt, T, 8) f32             -- [tl, tr, tt, tb, area, 0, 0, 0], compacted
#     lb_ref     : (1, A, 2) f32              -- [log(bias_w/W), log(bias_h/H)]
#     slab_ref   : (nt, 5, A, hw) f32         -- plane-major raw logits [x, y, w, h, obj]
#   output (8, 128): row0 warm xy dense, row1 warm wh dense, row2 dense noobj term
# --------------------------------------------------------------------------
def _dense_region_kernel(counts_ref, tru_ref, lb_ref, slab_ref, out_ref, *,
                         thresh, warm, height, width):
    nb = pl.program_id(0)              # batch-block index
    mb = pl.program_id(1)              # HW-tile index
    hw = slab_ref.shape[-1]

    slab = slab_ref[...]               # (nt, 5, A, hw)
    xl, yl, wl, hl, ol = (slab[:, p] for p in range(5))
    lb = lb_ref[...]                   # (1, A, 2)

    sig_x = jax.nn.sigmoid(xl)         # (nt, A, hw)
    sig_y = jax.nn.sigmoid(yl)
    sig_o = jax.nn.sigmoid(ol)
    bw = jnp.exp(wl + lb[:, :, 0:1])   # predicted box w/h (normalized), bias added in-kernel
    bh = jnp.exp(hl + lb[:, :, 1:2])

    # warm-stage dense targets: xy -> 0.5, wh -> 0, weight 0.01 (everywhere)
    if warm:
        dx = sig_x - 0.5
        dy = sig_y - 0.5
        l_xy = 0.01 * (jnp.sum(dx * dx) + jnp.sum(dy * dy))
        l_wh = 0.01 * (jnp.sum(wl * wl) + jnp.sum(hl * hl))
    else:
        l_xy = jnp.float32(0.0)
        l_wh = jnp.float32(0.0)

    # absolute cell centres for this lane-dense HW tile (true f32 divide keeps floor exact)
    idx_i = lax.broadcasted_iota(jnp.int32, (1, 1, hw), 2) + mb * hw
    idx = idx_i.astype(jnp.float32)
    row = jnp.floor((idx + 0.5) / jnp.float32(width))
    col = idx - row * width

    inv_w = jnp.float32(1.0 / width)
    inv_h = jnp.float32(1.0 / height)
    bx = (col + sig_x) * inv_w
    by = (row + sig_y) * inv_h
    box_l = bx - 0.5 * bw
    box_r = bx + 0.5 * bw
    box_t = by - 0.5 * bh
    box_b = by + 0.5 * bh
    b_area = bw * bh

    def truth_body(t, best):
        v = tru_ref[:, pl.ds(t, 1), :]                   # (nt, 1, 8)
        ix0 = jnp.maximum(box_l, v[:, :, 0:1])
        ix1 = jnp.minimum(box_r, v[:, :, 1:2])
        iy0 = jnp.maximum(box_t, v[:, :, 2:3])
        iy1 = jnp.minimum(box_b, v[:, :, 3:4])
        inter = jnp.maximum(ix1 - ix0, 0.0) * jnp.maximum(iy1 - iy0, 0.0)
        union = jnp.maximum(b_area + v[:, :, 4:5] - inter, EPS)
        iou = inter * pl.reciprocal(union, approx=True)  # divide -> EUP slot
        return jnp.maximum(best, iou)

    cnt = counts_ref[nb]                                 # dynamic trip count (#valid truths)
    best = lax.fori_loop(0, cnt, truth_body, jnp.zeros_like(b_area))

    l_noobj = jnp.sum(jnp.where(best > thresh, 0.0, sig_o * sig_o))

    # single full-tile store (no masked partial stores / RMW)
    rows8 = lax.broadcasted_iota(jnp.int32, (8, 128), 0)
    tile = jnp.where(rows8 == 0, l_xy, 0.0)
    tile = jnp.where(rows8 == 1, l_wh, tile)
    tile = jnp.where(rows8 == 2, l_noobj, tile)
    out_ref[...] = tile


# --------------------------------------------------------------------------
# tiling heuristics
# --------------------------------------------------------------------------
def _largest_divisor_leq(n, cap):
    cap = max(1, min(cap, n))
    for d in range(cap, 0, -1):
        if n % d == 0:
            return d
    return 1


def _choose_hw_tile(HW):
    if HW % 128 != 0:
        return HW                      # lane block must be a multiple of 128 or the full axis
    for t in (1024, 512, 256, 128):
        if t < HW and HW % t == 0:
            return t
    return HW


def _choose_tiles(N, A, HW):
    hw_tile = _choose_hw_tile(HW)
    num_mblocks = HW // hw_tile
    # ~11 live (nt, A, hw_tile) f32 planes in the truth loop; keep them near the 64-vreg file
    cap = max(1, (48 * 1024) // (11 * A * hw_tile))
    nt = _largest_divisor_leq(N, min(cap, 16))
    if num_mblocks * (N // nt) < 2 and N > 1:            # >=2 blocks so both v7x TCs get work
        nt = _largest_divisor_leq(N, max(1, nt // 2))
    return nt, N // nt, hw_tile, num_mblocks


def _dense_partials(counts_blk, tru, lb, slab, *, thresh, warm, height, width,
                    nt, num_nblocks, hw_tile, num_mblocks):
    A = slab.shape[2]
    T = tru.shape[1]
    kern = functools.partial(_dense_region_kernel, thresh=float(thresh), warm=bool(warm),
                             height=height, width=width)
    partials = pl.pallas_call(
        kern,
        grid=(num_nblocks, num_mblocks),
        in_specs=[
            pl.BlockSpec(memory_space=pltpu.MemorySpace.SMEM),                     # counts
            pl.BlockSpec((nt, T, 8), lambda nb, mb: (nb, 0, 0)),                   # truths
            pl.BlockSpec((1, A, 2), lambda nb, mb: (0, 0, 0)),                     # log-bias
            pl.BlockSpec((nt, 5, A, hw_tile), lambda nb, mb: (nb, 0, 0, mb)),      # slab
        ],
        out_specs=pl.BlockSpec((8, 128), lambda nb, mb: (nb, mb)),
        out_shape=jax.ShapeDtypeStruct((num_nblocks * 8, num_mblocks * 128), jnp.float32),
        compiler_params=pltpu.CompilerParams(
            dimension_semantics=("parallel", "parallel"),
            vmem_limit_bytes=32 * 1024 * 1024),
    )(counts_blk, tru, lb, slab)
    part = partials.reshape(num_nblocks, 8, num_mblocks, 128)
    sums = jnp.sum(part[:, :, :, 0], axis=(0, 2))        # (8,)
    return sums[0], sums[1], sums[2]                     # warm-xy, warm-wh, noobj (dense)


# --------------------------------------------------------------------------
# Full forward (RegionTargetLoss.forward, SoftMax variant)
# --------------------------------------------------------------------------
def region_target_loss(x, label, *,
                       num_classes=DEFAULT_NUM_CLASSES,
                       num_anchors=DEFAULT_NUM_ANCHORS,
                       biases=DEFAULT_BIASES,
                       coords=BBOX_DIM,
                       obj_esc_thresh=OBJ_ESC_THRESH,
                       rescore=RESCORE,
                       xy_scale=XY_SC, wh_scale=WH_SC,
                       object_scale=OBJ_SC, noobject_scale=NO_OBJ_SC,
                       coord_scale=COORD_SC,
                       anchor_aligned_images=NUM_IMAGES_WARM,
                       seen_images=SEEN_IMAGES):
    x = jnp.asarray(x, jnp.float32)
    N, ctot, H, W = x.shape
    A, C = num_anchors, num_classes
    HW = H * W
    assert ctot == A * (C + coords + OBJECTNESS_DIM)

    warm = bool(seen_images < anchor_aligned_images)

    bias_w = jnp.asarray(biases[0::2], jnp.float32)      # (A,)
    bias_h = jnp.asarray(biases[1::2], jnp.float32)

    # ---- labels: compact valid boxes to the front; per-image valid counts ----
    label = jnp.asarray(label, jnp.float32).reshape(N, -1, coords + 1)       # (N, T, 5)
    T = label.shape[1]
    valid0 = jnp.logical_and(label[..., 2] > 0.0, label[..., 3] > 0.0)
    order = jnp.argsort(jnp.logical_not(valid0).astype(jnp.int32), axis=1)   # stable
    labelc = jnp.take_along_axis(label, order[..., None], axis=1)
    counts_img = jnp.sum(valid0, axis=1).astype(jnp.int32)                   # (N,)

    nt, num_nblocks, hw_tile, num_mblocks = _choose_tiles(N, A, HW)
    counts_blk = jnp.max(counts_img.reshape(num_nblocks, nt), axis=1).astype(jnp.int32)

    # ---- dense-kernel inputs: one plane-major slab (single fused XLA relayout) ----
    xr = x.reshape(N, ctot, HW)
    xy = xr[:, :2 * A].reshape(N, A, 2, HW)
    wh = xr[:, 2 * A:4 * A].reshape(N, A, 2, HW)
    ob = xr[:, 4 * A:5 * A].reshape(N, A, 1, HW)
    slab = jnp.concatenate([xy, wh, ob], axis=2).transpose(0, 2, 1, 3)       # (N, 5, A, HW)

    lb = jnp.stack([jnp.log(bias_w / W), jnp.log(bias_h / H)], axis=-1).reshape(1, A, 2)

    txc, tyc, twc, thc = (labelc[..., k] for k in range(4))
    vf = jnp.logical_and(twc > 0.0, thc > 0.0).astype(jnp.float32)
    zeros = jnp.zeros_like(txc)
    tru = jnp.stack([(txc - 0.5 * twc) * vf, (txc + 0.5 * twc) * vf,
                     (tyc - 0.5 * thc) * vf, (tyc + 0.5 * thc) * vf,
                     (twc * thc) * vf, zeros, zeros, zeros], axis=-1)        # (N, T, 8)

    # ---- stage 1 (Pallas): dense partial sums ----
    xy_dense, wh_dense, noobj_dense = _dense_partials(
        counts_blk, tru, lb, slab, thresh=obj_esc_thresh, warm=warm,
        height=H, width=W, nt=nt, num_nblocks=num_nblocks,
        hw_tile=hw_tile, num_mblocks=num_mblocks)

    # ---- stage 2 (JAX, sparse): ground-truth matching + corrections at <= T cells/image ----
    tx, ty, tw, th, tcls = (labelc[..., k] for k in range(5))
    valid = jnp.logical_and(tw > 0.0, th > 0.0)

    j = jnp.clip(jnp.floor(tx * W), 0, W - 1).astype(jnp.int32)
    i = jnp.clip(jnp.floor(ty * H), 0, H - 1).astype(jnp.int32)
    cell = i * W + j                                                          # (N, T)

    # best anchor by shape-only IoU (boxes centred at the origin)
    aw = (bias_w / W)[None, None, :]
    ah = (bias_h / H)[None, None, :]
    inter_a = jnp.minimum(tw[..., None], aw) * jnp.minimum(th[..., None], ah)
    union_a = tw[..., None] * th[..., None] + aw * ah - inter_a
    best_a = jnp.argmax(inter_a / jnp.maximum(union_a, EPS), axis=-1).astype(jnp.int32)

    # gathers straight from the (N, ctot, HW) view of x (no dense repack needed)
    bn = jnp.arange(N, dtype=jnp.int32)[:, None]
    x_lg = xr[bn, 2 * best_a, cell]
    y_lg = xr[bn, 2 * best_a + 1, cell]
    w_lg = xr[bn, 2 * A + 2 * best_a, cell]
    h_lg = xr[bn, 2 * A + 2 * best_a + 1, cell]
    o_lg = xr[bn, 4 * A + best_a, cell]
    sx = jax.nn.sigmoid(x_lg)
    sy = jax.nn.sigmoid(y_lg)
    o_at = jax.nn.sigmoid(o_lg)

    baw = bias_w[best_a]
    bah = bias_h[best_a]
    pw = jnp.exp(w_lg) * baw / W
    ph = jnp.exp(h_lg) * bah / H
    px = (j.astype(jnp.float32) + sx) / W
    py = (i.astype(jnp.float32) + sy) / H

    def box_iou(ax, ay, aww, ahh, bx, by, bww, bhh):
        lx = jnp.maximum(ax - 0.5 * aww, bx - 0.5 * bww)
        rx = jnp.minimum(ax + 0.5 * aww, bx + 0.5 * bww)
        tt = jnp.maximum(ay - 0.5 * ahh, by - 0.5 * bhh)
        dn = jnp.minimum(ay + 0.5 * ahh, by + 0.5 * bhh)
        inter = jnp.maximum(rx - lx, 0.0) * jnp.maximum(dn - tt, 0.0)
        union = aww * ahh + bww * bhh - inter
        return inter / jnp.maximum(union, EPS)

    iou_p = box_iou(px, py, pw, ph, tx, ty, tw, th)                # pred vs own truth
    iou_all = box_iou(px[:, :, None], py[:, :, None], pw[:, :, None], ph[:, :, None],
                      tx[:, None, :], ty[:, None, :], tw[:, None, :], th[:, None, :])
    iou_all = jnp.where(valid[:, None, :], iou_all, 0.0)
    max_iou_cell = jnp.max(iou_all, axis=-1)                       # (N, T)

    # sequential-write semantics: the last valid truth writing an (anchor, cell) wins
    key = best_a * (H * W) + cell
    same = key[:, :, None] == key[:, None, :]
    later = jnp.arange(T)[None, :] > jnp.arange(T)[:, None]
    overridden = jnp.any(jnp.logical_and(jnp.logical_and(same, later[None]),
                                         valid[:, None, :]), axis=2)
    active = jnp.logical_and(valid, jnp.logical_not(overridden))
    m = active.astype(jnp.float32)

    # matched-cell targets / weights
    t_x = tx * W - j.astype(jnp.float32)
    t_y = ty * H - i.astype(jnp.float32)
    t_wt = jnp.log(jnp.maximum(tw * W / baw, EPS))
    t_ht = jnp.log(jnp.maximum(th * H / bah, EPS))
    wgt = coord_scale * (2.0 - tw * th)
    obj_tgt = iou_p if rescore else jnp.ones_like(iou_p)

    xy_new = wgt * ((sx - t_x) ** 2 + (sy - t_y) ** 2)
    wh_new = wgt * ((w_lg - t_wt) ** 2 + (h_lg - t_ht) ** 2)
    obj_new = (o_at - obj_tgt) ** 2

    if warm:
        xy_old = 0.01 * ((sx - 0.5) ** 2 + (sy - 0.5) ** 2)
        wh_old = 0.01 * (w_lg * w_lg + h_lg * h_lg)
    else:
        xy_old = 0.0
        wh_old = 0.0
    noobj_old = jnp.where(max_iou_cell > obj_esc_thresh, 0.0, o_at * o_at)

    # sparse softmax-CE at matched cells (ignore_label = -1, VALID normalization)
    cls_idx = jnp.arange(C, dtype=jnp.int32)[None, None, :]
    logits = xr[bn[:, :, None], 5 * A + best_a[:, :, None] * C + cls_idx, cell[:, :, None]]
    mx = jnp.max(logits, axis=-1)
    lse = mx + jnp.log(jnp.sum(jnp.exp(logits - mx[..., None]), axis=-1))
    cls_i = jnp.clip(tcls.astype(jnp.int32), 0, C - 1)
    picked = jnp.take_along_axis(logits, cls_i[..., None], axis=-1)[..., 0]
    ce_new = lse - picked
    m_ce = m * (tcls >= 0.0).astype(jnp.float32)                   # honor ignore_label = -1

    # ---- combine dense partials + sparse corrections ----
    l_xy = xy_dense + jnp.sum(m * (xy_new - xy_old))
    l_wh = wh_dense + jnp.sum(m * (wh_new - wh_old))
    l_obj = jnp.sum(m * obj_new)
    l_noobj = noobj_dense - jnp.sum(m * noobj_old)
    ce_sum = jnp.sum(m_ce * ce_new)
    n_ce = jnp.sum(m_ce)

    euclid = (xy_scale * l_xy + wh_scale * l_wh
              + object_scale * l_obj + noobject_scale * l_noobj) / (2.0 * N)
    ce = ce_sum / jnp.maximum(n_ce, 1.0)
    return euclid + ce


if __name__ == "__main__":
    key = jax.random.PRNGKey(0)
    N, H, W = 2, 16, 16
    A, C = DEFAULT_NUM_ANCHORS, DEFAULT_NUM_CLASSES
    T = 8                      # max ground-truth boxes per image
    n_valid_boxes = 3

    k1, k2, k3, k4 = jax.random.split(key, 4)
    x = 0.5 * jax.random.normal(k1, (N, A * (C + BBOX_DIM + OBJECTNESS_DIM), H, W), jnp.float32)

    # label rows: (x, y, w, h, cls) normalized to [0, 1]; zero-padded to T boxes
    cxy = jax.random.uniform(k2, (N, T, 2), minval=0.05, maxval=0.95)
    whb = jax.random.uniform(k3, (N, T, 2), minval=0.05, maxval=0.5)
    cls = jax.random.randint(k4, (N, T, 1), 0, C).astype(jnp.float32)
    boxes = jnp.concatenate([cxy, whb, cls], axis=-1)
    valid_mask = (jnp.arange(T) < n_valid_boxes)[None, :, None]
    label = jnp.where(valid_mask, boxes, 0.0).reshape(N, T * 5).astype(jnp.float32)

    loss = jax.jit(region_target_loss)(x, label)
    jax.block_until_ready(loss)
    assert loss.shape == () and bool(jnp.isfinite(loss))
    print("KERNEL_OK")
</pallas_src>

<mosaic_0001>
module attributes {stable_mosaic.version = 11 : i64} {
  func.func @_dense_region_kernel(%arg0: i32, %arg1: i32, %arg2: memref<1xi32, #tpu.memory_space<smem>>, %arg3: memref<2x8x8xf32, #tpu.memory_space<vmem>>, %arg4: memref<1x5x2xf32, #tpu.memory_space<vmem>>, %arg5: memref<2x5x5x128xf32, #tpu.memory_space<vmem>>, %arg6: memref<8x128xf32, #tpu.memory_space<vmem>>) attributes {dimension_semantics = [#tpu.dimension_semantics<parallel>, #tpu.dimension_semantics<parallel>], iteration_bounds = array<i64: 1, 2>, scalar_prefetch = 0 : i64, scratch_operands = 0 : i64, tpu.core_type = #tpu.core_type<tc>, window_params = [{transform_indices = @transform_0, window_bounds = array<i64: 1>}, {transform_indices = @transform_1, window_bounds = array<i64: 2, 8, 8>}, {pipeline_mode = #tpu.pipeline_mode<synchronous>, transform_indices = @transform_2, window_bounds = array<i64: 1, 5, 2>}, {transform_indices = @transform_3, window_bounds = array<i64: 2, 5, 5, 128>}, {transform_indices = @transform_4, window_bounds = array<i64: 8, 128>}]} {
    %c0 = arith.constant 0 : index
    %c0_0 = arith.constant 0 : index
    %c0_1 = arith.constant 0 : index
    %c0_2 = arith.constant 0 : index
    %0 = vector.load %arg5[%c0, %c0_0, %c0_1, %c0_2] : memref<2x5x5x128xf32, #tpu.memory_space<vmem>>, vector<2x5x5x128xf32>
    %1 = vector.extract_strided_slice %0 {offsets = [0, 0, 0, 0], sizes = [2, 1, 5, 128], strides = [1, 1, 1, 1]} : vector<2x5x5x128xf32> to vector<2x1x5x128xf32>
    %2 = vector.shape_cast %1 : vector<2x1x5x128xf32> to vector<2x5x128xf32>
    %3 = vector.extract_strided_slice %0 {offsets = [0, 1, 0, 0], sizes = [2, 1, 5, 128], strides = [1, 1, 1, 1]} : vector<2x5x5x128xf32> to vector<2x1x5x128xf32>
    %4 = vector.shape_cast %3 : vector<2x1x5x128xf32> to vector<2x5x128xf32>
    %5 = vector.extract_strided_slice %0 {offsets = [0, 2, 0, 0], sizes = [2, 1, 5, 128], strides = [1, 1, 1, 1]} : vector<2x5x5x128xf32> to vector<2x1x5x128xf32>
    %6 = vector.shape_cast %5 : vector<2x1x5x128xf32> to vector<2x5x128xf32>
    %7 = vector.extract_strided_slice %0 {offsets = [0, 3, 0, 0], sizes = [2, 1, 5, 128], strides = [1, 1, 1, 1]} : vector<2x5x5x128xf32> to vector<2x1x5x128xf32>
    %8 = vector.shape_cast %7 : vector<2x1x5x128xf32> to vector<2x5x128xf32>
    %9 = vector.extract_strided_slice %0 {offsets = [0, 4, 0, 0], sizes = [2, 1, 5, 128], strides = [1, 1, 1, 1]} : vector<2x5x5x128xf32> to vector<2x1x5x128xf32>
    %10 = vector.shape_cast %9 : vector<2x1x5x128xf32> to vector<2x5x128xf32>
    %c0_3 = arith.constant 0 : index
    %c0_4 = arith.constant 0 : index
    %c0_5 = arith.constant 0 : index
    %11 = vector.load %arg4[%c0_3, %c0_4, %c0_5] : memref<1x5x2xf32, #tpu.memory_space<vmem>>, vector<1x5x2xf32>
    %12 = arith.negf %2 : vector<2x5x128xf32>
    %13 = math.exp %12 : vector<2x5x128xf32>
    %cst = arith.constant 1.000000e+00 : f32
    %14 = vector.broadcast %cst : f32 to vector<2x5x128xf32>
    %15 = arith.addf %14, %13 : vector<2x5x128xf32>
    %16 = arith.divf %14, %15 : vector<2x5x128xf32>
    %17 = arith.negf %4 : vector<2x5x128xf32>
    %18 = math.exp %17 : vector<2x5x128xf32>
    %cst_6 = arith.constant 1.000000e+00 : f32
    %19 = vector.broadcast %cst_6 : f32 to vector<2x5x128xf32>
    %20 = arith.addf %19, %18 : vector<2x5x128xf32>
    %21 = arith.divf %19, %20 : vector<2x5x128xf32>
    %22 = arith.negf %10 : vector<2x5x128xf32>
    %23 = math.exp %22 : vector<2x5x128xf32>
    %cst_7 = arith.constant 1.000000e+00 : f32
    %24 = vector.broadcast %cst_7 : f32 to vector<2x5x128xf32>
    %25 = arith.addf %24, %23 : vector<2x5x128xf32>
    %26 = arith.divf %24, %25 : vector<2x5x128xf32>
    %27 = vector.extract_strided_slice %11 {offsets = [0, 0, 0], sizes = [1, 5, 1], strides = [1, 1, 1]} : vector<1x5x2xf32> to vector<1x5x1xf32>
    %28 = vector.broadcast %27 : vector<1x5x1xf32> to vector<2x5x128xf32>
    %29 = arith.addf %6, %28 : vector<2x5x128xf32>
    %30 = math.exp %29 : vector<2x5x128xf32>
    %31 = vector.extract_strided_slice %11 {offsets = [0, 0, 1], sizes = [1, 5, 1], strides = [1, 1, 1]} : vector<1x5x2xf32> to vector<1x5x1xf32>
    %32 = vector.broadcast %31 : vector<1x5x1xf32> to vector<2x5x128xf32>
    %33 = arith.addf %8, %32 : vector<2x5x128xf32>
    %34 = math.exp %33 : vector<2x5x128xf32>
    %cst_8 = arith.constant 5.000000e-01 : f32
    %35 = vector.broadcast %cst_8 : f32 to vector<2x5x128xf32>
    %36 = arith.subf %16, %35 : vector<2x5x128xf32>
    %cst_9 = arith.constant 5.000000e-01 : f32
    %37 = vector.broadcast %cst_9 : f32 to vector<2x5x128xf32>
    %38 = arith.subf %21, %37 : vector<2x5x128xf32>
    %39 = arith.mulf %36, %36 : vector<2x5x128xf32>
    %40 = vector.shape_cast %39 : vector<2x5x128xf32> to vector<1x2x5x128xf32>
    %cst_10 = arith.constant dense<0.000000e+00> : vector<1xf32>
    %41 = vector.multi_reduction <add>, %40, %cst_10 [1, 2, 3] : vector<1x2x5x128xf32> to vector<1xf32>
    %42 = vector.shape_cast %41 : vector<1xf32> to vector<1x1x1x1xf32>
    %43 = vector.extract %42[0, 0, 0, 0] : f32 from vector<1x1x1x1xf32>
    %44 = arith.mulf %38, %38 : vector<2x5x128xf32>
    %45 = vector.shape_cast %44 : vector<2x5x128xf32> to vector<1x2x5x128xf32>
    %cst_11 = arith.constant dense<0.000000e+00> : vector<1xf32>
    %46 = vector.multi_reduction <add>, %45, %cst_11 [1, 2, 3] : vector<1x2x5x128xf32> to vector<1xf32>
    %47 = vector.shape_cast %46 : vector<1xf32> to vector<1x1x1x1xf32>
    %48 = vector.extract %47[0, 0, 0, 0] : f32 from vector<1x1x1x1xf32>
    %49 = arith.addf %43, %48 : f32
    %cst_12 = arith.constant 0.00999999977 : f32
    %50 = arith.mulf %cst_12, %49 : f32
    %51 = arith.mulf %6, %6 : vector<2x5x128xf32>
    %52 = vector.shape_cast %51 : vector<2x5x128xf32> to vector<1x2x5x128xf32>
    %cst_13 = arith.constant dense<0.000000e+00> : vector<1xf32>
    %53 = vector.multi_reduction <add>, %52, %cst_13 [1, 2, 3] : vector<1x2x5x128xf32> to vector<1xf32>
    %54 = vector.shape_cast %53 : vector<1xf32> to vector<1x1x1x1xf32>
    %55 = vector.extract %54[0, 0, 0, 0] : f32 from vector<1x1x1x1xf32>
    %56 = arith.mulf %8, %8 : vector<2x5x128xf32>
    %57 = vector.shape_cast %56 : vector<2x5x128xf32> to vector<1x2x5x128xf32>
    %cst_14 = arith.constant dense<0.000000e+00> : vector<1xf32>
    %58 = vector.multi_reduction <add>, %57, %cst_14 [1, 2, 3] : vector<1x2x5x128xf32> to vector<1xf32>
    %59 = vector.shape_cast %58 : vector<1xf32> to vector<1x1x1x1xf32>
    %60 = vector.extract %59[0, 0, 0, 0] : f32 from vector<1x1x1x1xf32>
    %61 = arith.addf %55, %60 : f32
    %cst_15 = arith.constant 0.00999999977 : f32
    %62 = arith.mulf %cst_15, %61 : f32
    %63 = tpu.iota {dimensions = array<i32: 2>} : vector<1x1x128xi32>
    %c128_i32 = arith.constant 128 : i32
    %64 = arith.muli %arg1, %c128_i32 : i32
    %65 = vector.broadcast %64 : i32 to vector<1x1x128xi32>
    %66 = arith.addi %63, %65 : vector<1x1x128xi32>
    %67 = arith.sitofp %66 : vector<1x1x128xi32> to vector<1x1x128xf32>
    %cst_16 = arith.constant 5.000000e-01 : f32
    %68 = vector.broadcast %cst_16 : f32 to vector<1x1x128xf32>
    %69 = arith.addf %67, %68 : vector<1x1x128xf32>
    %cst_17 = arith.constant 1.600000e+01 : f32
    %70 = vector.broadcast %cst_17 : f32 to vector<1x1x128xf32>
    %71 = arith.divf %69, %70 : vector<1x1x128xf32>
    %72 = math.floor %71 : vector<1x1x128xf32>
    %cst_18 = arith.constant 1.600000e+01 : f32
    %73 = vector.broadcast %cst_18 : f32 to vector<1x1x128xf32>
    %74 = arith.mulf %72, %73 : vector<1x1x128xf32>
    %75 = arith.subf %67, %74 : vector<1x1x128xf32>
    %76 = vector.broadcast %75 : vector<1x1x128xf32> to vector<2x5x128xf32>
    %77 = arith.addf %76, %16 : vector<2x5x128xf32>
    %cst_19 = arith.constant 6.250000e-02 : f32
    %78 = vector.broadcast %cst_19 : f32 to vector<2x5x128xf32>
    %79 = arith.mulf %77, %78 : vector<2x5x128xf32>
    %80 = vector.broadcast %72 : vector<1x1x128xf32> to vector<2x5x128xf32>
    %81 = arith.addf %80, %21 : vector<2x5x128xf32>
    %cst_20 = arith.constant 6.250000e-02 : f32
    %82 = vector.broadcast %cst_20 : f32 to vector<2x5x128xf32>
    %83 = arith.mulf %81, %82 : vector<2x5x128xf32>
    %cst_21 = arith.constant 5.000000e-01 : f32
    %84 = vector.broadcast %cst_21 : f32 to vector<2x5x128xf32>
    %85 = arith.mulf %84, %30 : vector<2x5x128xf32>
    %86 = arith.subf %79, %85 : vector<2x5x128xf32>
    %cst_22 = arith.constant 5.000000e-01 : f32
    %87 = vector.broadcast %cst_22 : f32 to vector<2x5x128xf32>
    %88 = arith.mulf %87, %30 : vector<2x5x128xf32>
    %89 = arith.addf %79, %88 : vector<2x5x128xf32>
    %cst_23 = arith.constant 5.000000e-01 : f32
    %90 = vector.broadcast %cst_23 : f32 to vector<2x5x128xf32>
    %91 = arith.mulf %90, %34 : vector<2x5x128xf32>
    %92 = arith.subf %83, %91 : vector<2x5x128xf32>
    %cst_24 = arith.constant 5.000000e-01 : f32
    %93 = vector.broadcast %cst_24 : f32 to vector<2x5x128xf32>
    %94 = arith.mulf %93, %34 : vector<2x5x128xf32>
    %95 = arith.addf %83, %94 : vector<2x5x128xf32>
    %96 = arith.mulf %30, %34 : vector<2x5x128xf32>
    %97 = arith.index_cast %arg0 : i32 to index
    %98 = memref.load %arg2[%97] : memref<1xi32, #tpu.memory_space<smem>>
    %cst_25 = arith.constant 0.000000e+00 : f32
    %99 = vector.broadcast %cst_25 : f32 to vector<2x5x128xf32>
    %c0_i32 = arith.constant 0 : i32
    %100 = arith.subi %98, %c0_i32 : i32
    %101 = arith.addi %c0_i32, %100 : i32
    %c1_i32 = arith.constant 1 : i32
    %102 = scf.for %arg7 = %c0_i32 to %101 step %c1_i32 iter_args(%arg8 = %99) -> (vector<2x5x128xf32>)  : i32 {
      %c0_34 = arith.constant 0 : index
      %127 = arith.index_cast %arg7 : i32 to index
      %c0_35 = arith.constant 0 : index
      %128 = vector.load %arg3[%c0_34, %127, %c0_35] : memref<2x8x8xf32, #tpu.memory_space<vmem>>, vector<2x1x8xf32>
      %129 = vector.extract_strided_slice %128 {offsets = [0, 0, 0], sizes = [2, 1, 1], strides = [1, 1, 1]} : vector<2x1x8xf32> to vector<2x1x1xf32>
      %130 = vector.broadcast %129 : vector<2x1x1xf32> to vector<2x5x128xf32>
      %131 = arith.maximumf %86, %130 : vector<2x5x128xf32>
      %132 = vector.extract_strided_slice %128 {offsets = [0, 0, 1], sizes = [2, 1, 1], strides = [1, 1, 1]} : vector<2x1x8xf32> to vector<2x1x1xf32>
      %133 = vector.broadcast %132 : vector<2x1x1xf32> to vector<2x5x128xf32>
      %134 = arith.minimumf %89, %133 : vector<2x5x128xf32>
      %135 = vector.extract_strided_slice %128 {offsets = [0, 0, 2], sizes = [2, 1, 1], strides = [1, 1, 1]} : vector<2x1x8xf32> to vector<2x1x1xf32>
      %136 = vector.broadcast %135 : vector<2x1x1xf32> to vector<2x5x128xf32>
      %137 = arith.maximumf %92, %136 : vector<2x5x128xf32>
      %138 = vector.extract_strided_slice %128 {offsets = [0, 0, 3], sizes = [2, 1, 1], strides = [1, 1, 1]} : vector<2x1x8xf32> to vector<2x1x1xf32>
      %139 = vector.broadcast %138 : vector<2x1x1xf32> to vector<2x5x128xf32>
      %140 = arith.minimumf %95, %139 : vector<2x5x128xf32>
      %141 = arith.subf %134, %131 : vector<2x5x128xf32>
      %cst_36 = arith.constant 0.000000e+00 : f32
      %142 = vector.broadcast %cst_36 : f32 to vector<2x5x128xf32>
      %143 = arith.maximumf %141, %142 : vector<2x5x128xf32>
      %144 = arith.subf %140, %137 : vector<2x5x128xf32>
      %cst_37 = arith.constant 0.000000e+00 : f32
      %145 = vector.broadcast %cst_37 : f32 to vector<2x5x128xf32>
      %146 = arith.maximumf %144, %145 : vector<2x5x128xf32>
      %147 = arith.mulf %143, %146 : vector<2x5x128xf32>
      %148 = vector.extract_strided_slice %128 {offsets = [0, 0, 4], sizes = [2, 1, 1], strides = [1, 1, 1]} : vector<2x1x8xf32> to vector<2x1x1xf32>
      %149 = vector.broadcast %148 : vector<2x1x1xf32> to vector<2x5x128xf32>
      %150 = arith.addf %96, %149 : vector<2x5x128xf32>
      %151 = arith.subf %150, %147 : vector<2x5x128xf32>
      %cst_38 = arith.constant 1.000000e-10 : f32
      %152 = vector.broadcast %cst_38 : f32 to vector<2x5x128xf32>
      %153 = arith.maximumf %151, %152 : vector<2x5x128xf32>
      %154 = tpu.reciprocal %153 {approx = true} : vector<2x5x128xf32> -> vector<2x5x128xf32>
      %155 = arith.mulf %147, %154 : vector<2x5x128xf32>
      %156 = arith.maximumf %arg8, %155 : vector<2x5x128xf32>
      scf.yield %156 : vector<2x5x128xf32>
    }
    %cst_26 = arith.constant 6.000000e-01 : f32
    %103 = vector.broadcast %cst_26 : f32 to vector<2x5x128xf32>
    %104 = arith.cmpf ogt, %102, %103 : vector<2x5x128xf32>
    %105 = arith.mulf %26, %26 : vector<2x5x128xf32>
    %cst_27 = arith.constant 0.000000e+00 : f32
    %106 = vector.broadcast %cst_27 : f32 to vector<2x5x128xf32>
    %107 = arith.select %104, %106, %105 : vector<2x5x128xi1>, vector<2x5x128xf32>
    %108 = vector.shape_cast %107 : vector<2x5x128xf32> to vector<1x2x5x128xf32>
    %cst_28 = arith.constant dense<0.000000e+00> : vector<1xf32>
    %109 = vector.multi_reduction <add>, %108, %cst_28 [1, 2, 3] : vector<1x2x5x128xf32> to vector<1xf32>
    %110 = vector.shape_cast %109 : vector<1xf32> to vector<1x1x1x1xf32>
    %111 = vector.extract %110[0, 0, 0, 0] : f32 from vector<1x1x1x1xf32>
    %112 = tpu.iota {dimensions = array<i32: 0>} : vector<8x128xi32>
    %c0_i32_29 = arith.constant 0 : i32
    %113 = vector.broadcast %c0_i32_29 : i32 to vector<8x128xi32>
    %114 = arith.cmpi eq, %112, %113 : vector<8x128xi32>
    %cst_30 = arith.constant 0.000000e+00 : f32
    %115 = vector.broadcast %50 : f32 to vector<8x128xf32>
    %116 = vector.broadcast %cst_30 : f32 to vector<8x128xf32>
    %117 = arith.select %114, %115, %116 : vector<8x128xi1>, vector<8x128xf32>
    %c1_i32_31 = arith.constant 1 : i32
    %118 = vector.broadcast %c1_i32_31 : i32 to vector<8x128xi32>
    %119 = arith.cmpi eq, %112, %118 : vector<8x128xi32>
    %120 = vector.broadcast %62 : f32 to vector<8x128xf32>
    %121 = arith.select %119, %120, %117 : vector<8x128xi1>, vector<8x128xf32>
    %c2_i32 = arith.constant 2 : i32
    %122 = vector.broadcast %c2_i32 : i32 to vector<8x128xi32>
    %123 = arith.cmpi eq, %112, %122 : vector<8x128xi32>
    %124 = vector.broadcast %111 : f32 to vector<8x128xf32>
    %125 = arith.select %123, %124, %121 : vector<8x128xi1>, vector<8x128xf32>
    %c0_32 = arith.constant 0 : index
    %c0_33 = arith.constant 0 : index
    %126 = vector.load %arg6[%c0_32, %c0_33] : memref<8x128xf32, #tpu.memory_space<vmem>>, vector<8x128xf32>
    tpu.vector_store %arg6[%c0_32, %c0_33], %125 {strides = array<i32>} : memref<8x128xf32, #tpu.memory_space<vmem>>, vector<8x128xf32>,
    return
  }
  func.func @transform_0(%arg0: i32, %arg1: i32) -> i32 {
    %c0_i32 = arith.constant 0 : i32
    %c0_i32_0 = arith.constant 0 : i32
    return %c0_i32 : i32
  }
  func.func @transform_1(%arg0: i32, %arg1: i32) -> (i32, i32, i32) {
    %c0_i32 = arith.constant 0 : i32
    %c0_i32_0 = arith.constant 0 : i32
    %c0_i32_1 = arith.constant 0 : i32
    return %arg0, %c0_i32, %c0_i32_0 : i32, i32, i32
  }
  func.func @transform_2(%arg0: i32, %arg1: i32) -> (i32, i32, i32) {
    %c0_i32 = arith.constant 0 : i32
    %c0_i32_0 = arith.constant 0 : i32
    %c0_i32_1 = arith.constant 0 : i32
    %c0_i32_2 = arith.constant 0 : i32
    return %c0_i32, %c0_i32_0, %c0_i32_1 : i32, i32, i32
  }
  func.func @transform_3(%arg0: i32, %arg1: i32) -> (i32, i32, i32, i32) {
    %c0_i32 = arith.constant 0 : i32
    %c0_i32_0 = arith.constant 0 : i32
    %c0_i32_1 = arith.constant 0 : i32
    return %arg0, %c0_i32, %c0_i32_0, %arg1 : i32, i32, i32, i32
  }
  func.func @transform_4(%arg0: i32, %arg1: i32) -> (i32, i32) {
    %c0_i32 = arith.constant 0 : i32
    return %arg0, %arg1 : i32, i32
  }
}

</mosaic_0001>

<llo_original>
// kernel: region_target_loss.1
$region0: #{region_target_loss.1}
  #allocation0 [shape = 'u32[]', space=smem, size = 0x4, offset = 0x4, fixed_abs, tag = 'smem constant byte address 0x4 - core index']
  #allocation1 [shape = 'u32[72,128]{1,0:T(1,128)}', space=vmem, size = 0x9000, scoped, tag = 'internal scratch']
  #allocation2 [shape = 's32[1]{0:T(128)S(6)}', space=smem, size = 0x200, scoped, tag = 'scoped memory for region_target_loss.1']
  %s0 = inlined_call_operand.<no memory space> [shape: s32[1], index: 0, kind: input, shape index: {}]
  %s1 = inlined_call_operand.vmem [shape: f32[2,8,8], index: 1, kind: input, shape index: {}]
  %s2 = inlined_call_operand.vmem [shape: f32[1,5,2], index: 2, kind: input, shape index: {}]
  %s3 = inlined_call_operand.vmem [shape: f32[2,5,5,256], index: 3, kind: input, shape index: {}]
  %s4 = inlined_call_operand.vmem [shape: f32[8,256], index: 4, kind: output, shape index: {}]
  %s5 = sld [smem:[#allocation0]]
  $region94: #{region_target_loss.1} parent=0
    _
  %s7 = ssub.s32 1, %s5
  %s8 = scalar_select 0, %s7, %s5
  %9 = sst [smem:[#allocation2]] %s0
  $region1: #{region_target_loss.1} parent=0
    #allocation3 [shape = 'u8[81920]{0}', space=vmem, size = 0x14000, scoped, tag = 'input window, operand 3']
    loop: start=0, step=1, limit=4
    $region2: #{region_target_loss.1} parent=1 // loop_pre_header
      _
    $region3: #{region_target_loss.1} parent=1 // loop_header
      %s11 = sphi 0, %s15
      %p12 = scmp.ge.s32.totalorder %s11, 4
      %s18 = sphi 0, %s30
      %s19 = sphi 0, %s26
      %s20 = sphi 0, %s18
      %s21 = sphi 0, %s19
      %s22 = sphi 0, %s20
      %s23 = sphi 0, %s21
      %s31 = sphi 0, %s31
      %s33 = sphi 0, %s31
      %s34 = sphi 0, %s33
      %s48 = sphi 0, %s34
      %s54 = sphi 0, %s56
      %s57 = sphi 0, %s54
      %s58 = sphi 0, %s57
      %s74 = sphi 0, %s58
      %s78 = sphi 0, %s78
      %s80 = sphi 0, %s78
      %s81 = sphi 0, %s80
      %s95 = sphi 0, %s81
      %s103 = sphi 0, %s105
      %s106 = sphi 0, %s103
      %s107 = sphi 0, %s106
      %s123 = sphi 0, %s107
      %s131 = sphi 0, %s133
      %s134 = sphi 0, %s131
      %s135 = sphi 0, %s134
      %s151 = sphi 0, %s135
    $region4: #{region_target_loss.1} parent=1 // loop_header_branch
      %14 = sbr.rel (%p12) target = $region8
    $region5: #{region_target_loss.1} parent=1 // loop_body
      %s16 = ssub.s32 %s11, 1
      %s17 = ssub.s32 %s11, 2
      %s24 = sadd.s32 1, %s19
      %p25 = scmp.ge.s32.totalorder %s24, 2
      %s26 = scalar_select %p25, 0, %s24
      %s27 = sadd.s32 1, %s18
      %s28 = scalar_select %p25, %s27, %s18
      %p29 = scmp.ge.s32.totalorder %s28, 1
      %s30 = scalar_select %p29, 0, %s28
      %s32 = sadd.s32 %s31, 1
      %p35 = scmp.eq.s32.totalorder %s11, 1
      %p36 = scmp.ne.s32.totalorder %s31, %s33
      %p37 = scmp.eq.s32.totalorder %s11, 0
      %p38 = por %p36, %p37
      %p39 = scmp.ne.s32.totalorder %s31, %s33
      %p40 = scmp.eq.s32.totalorder %s16, 1
      %p41 = por %p39, %p40
      %p42 = scmp.ne.s32.totalorder %s33, %s34
      %p43 = scmp.eq.s32.totalorder %s16, 0
      %p44 = por %p42, %p43
      %p45 = scmp.ne.s32.totalorder %s33, %s34
      %p46 = scmp.eq.s32.totalorder %s17, 1
      %p47 = por %p45, %p46
      %p49 = scmp.ne.s32.totalorder %s34, %s48
      %p50 = scmp.eq.s32.totalorder %s17, 0
      %p51 = por %p49, %p50
      %s52 = ssub.s32 %s18, %s30
      %p53 = scmp.eq.s32.totalorder %s52, 0
      %s55 = sadd.s32 %s54, 1
      %s56 = scalar_select %p53, %s54, %s55
      %p59 = pneg %p53
      %p60 = scmp.eq.s32.totalorder %s11, 1
      %p61 = por %p59, %p60
      %p62 = scmp.ne.s32.totalorder %s54, %s57
      %p63 = scmp.eq.s32.totalorder %s11, 0
      %p64 = por %p62, %p63
      %p65 = scmp.ne.s32.totalorder %s54, %s57
      %p66 = scmp.eq.s32.totalorder %s16, 1
      %p67 = por %p65, %p66
      %p68 = scmp.ne.s32.totalorder %s57, %s58
      %p69 = scmp.eq.s32.totalorder %s16, 0
      %p70 = por %p68, %p69
      %p71 = scmp.ne.s32.totalorder %s57, %s58
      %p72 = scmp.eq.s32.totalorder %s17, 1
      %p73 = por %p71, %p72
      %p75 = scmp.ne.s32.totalorder %s58, %s74
      %p76 = scmp.eq.s32.totalorder %s17, 0
      %p77 = por %p75, %p76
      %s79 = sadd.s32 %s78, 1
      %p82 = scmp.eq.s32.totalorder %s11, 1
      %p83 = scmp.ne.s32.totalorder %s78, %s80
      %p84 = scmp.eq.s32.totalorder %s11, 0
      %p85 = por %p83, %p84
      %p86 = scmp.ne.s32.totalorder %s78, %s80
      %p87 = scmp.eq.s32.totalorder %s16, 1
      %p88 = por %p86, %p87
      %p89 = scmp.ne.s32.totalorder %s80, %s81
      %p90 = scmp.eq.s32.totalorder %s16, 0
      %p91 = por %p89, %p90
      %p92 = scmp.ne.s32.totalorder %s80, %s81
      %p93 = scmp.eq.s32.totalorder %s17, 1
      %p94 = por %p92, %p93
      %p96 = scmp.ne.s32.totalorder %s81, %s95
      %p97 = scmp.eq.s32.totalorder %s17, 0
      %p98 = por %p96, %p97
      %s99 = ssub.s32 %s18, %s30
      %s100 = ssub.s32 %s19, %s26
      %s101 = sor.u32 %s99, %s100
      %p102 = scmp.eq.s32.totalorder %s101, 0
      %s104 = sadd.s32 %s103, 1
      %s105 = scalar_select %p102, %s103, %s104
      %p108 = pneg %p102
      %p109 = scmp.eq.s32.totalorder %s11, 1
      %p110 = por %p108, %p109
      %p111 = scmp.ne.s32.totalorder %s103, %s106
      %p112 = scmp.eq.s32.totalorder %s11, 0
      %p113 = por %p111, %p112
      %p114 = scmp.ne.s32.totalorder %s103, %s106
      %p115 = scmp.eq.s32.totalorder %s16, 1
      %p116 = por %p114, %p115
      %p117 = scmp.ne.s32.totalorder %s106, %s107
      %p118 = scmp.eq.s32.totalorder %s16, 0
      %p119 = por %p117, %p118
      %p120 = scmp.ne.s32.totalorder %s106, %s107
      %p121 = scmp.eq.s32.totalorder %s17, 1
      %p122 = por %p120, %p121
      %p124 = scmp.ne.s32.totalorder %s107, %s123
      %p125 = scmp.eq.s32.totalorder %s17, 0
      %p126 = por %p124, %p125
      %s127 = ssub.s32 %s18, %s30
      %s128 = ssub.s32 %s19, %s26
      %s129 = sor.u32 %s127, %s128
      %p130 = scmp.eq.s32.totalorder %s129, 0
      %s132 = sadd.s32 %s131, 1
      %s133 = scalar_select %p130, %s131, %s132
      %p136 = pneg %p130
      %p137 = scmp.eq.s32.totalorder %s11, 1
      %p138 = por %p136, %p137
      %p139 = scmp.ne.s32.totalorder %s131, %s134
      %p140 = scmp.eq.s32.totalorder %s11, 0
      %p141 = por %p139, %p140
      %p142 = scmp.ne.s32.totalorder %s131, %s134
      %p143 = scmp.eq.s32.totalorder %s16, 1
      %p144 = por %p142, %p143
      %p145 = scmp.ne.s32.totalorder %s134, %s135
      %p146 = scmp.eq.s32.totalorder %s16, 0
      %p147 = por %p145, %p146
      %p148 = scmp.ne.s32.totalorder %s134, %s135
      %p149 = scmp.eq.s32.totalorder %s17, 1
      %p150 = por %p148, %p149
      %p152 = scmp.ne.s32.totalorder %s135, %s151
      %p153 = scmp.eq.s32.totalorder %s17, 0
      %p154 = por %p152, %p153
      %p155 = scmp.le.s32.totalorder 1, %s11
      %p156 = scmp.lt.s32.totalorder %s11, 3
      %p157 = pnand %p155, %p156
      %p158 = pneg %p157
      // Predicated region
      $region9: #{region_target_loss.1} parent=5 // pred_check
        _
      $region10: #{region_target_loss.1} parent=5 // pred_check_branch
        %160 = sbr.rel (%p157) target = $region12
      $region11: #{region_target_loss.1} parent=5 // pred_region
        %s161 = ssub.s32 %s11, 1
        // Predicated region
        $region13: #{region_target_loss.1} parent=11 // pred_check
          %p162 = pneg %p44
        $region14: #{region_target_loss.1} parent=11 // pred_check_branch
          %164 = sbr.rel (%p162) target = $region16
        $region15: #{region_target_loss.1} parent=11 // pred_region
          _
        $region16: #{region_target_loss.1} parent=11 // pred_fallthru
          _
        // Predicated region
        $region17: #{region_target_loss.1} parent=11 // pred_check
          %p165 = pneg %p70
        $region18: #{region_target_loss.1} parent=11 // pred_check_branch
          %167 = sbr.rel (%p165) target = $region20
        $region19: #{region_target_loss.1} parent=11 // pred_region
          %s168 = smul.u32 2, %s20
          %p169 = scmp.lt.s32.totalorder %s168, 1
          %s170 = scalar_select %p169, %s168, 1
          %s171 = smul.addr %s170, 8
          %s172 = scalar_lea.vmem %s1, %s171
          %s173 = smul.u32 2, %s20
        $region20: #{region_target_loss.1} parent=11 // pred_fallthru
          _
        // Predicated region
        $region21: #{region_target_loss.1} parent=11 // pred_check
          %p174 = pneg %p91
        $region22: #{region_target_loss.1} parent=11 // pred_check_branch
          %176 = sbr.rel (%p174) target = $region24
        $region23: #{region_target_loss.1} parent=11 // pred_region
          _
        $region24: #{region_target_loss.1} parent=11 // pred_fallthru
          _
      $region12: #{region_target_loss.1} parent=5 // pred_fallthru
        _
      %p177 = scmp.lt.s32.totalorder %s11, 2
      // Predicated region
      $region25: #{region_target_loss.1} parent=5 // pred_check
        %p178 = pneg %p177
      $region26: #{region_target_loss.1} parent=5 // pred_check_branch
        %180 = sbr.rel (%p178) target = $region28
      $region27: #{region_target_loss.1} parent=5 // pred_region
        // Predicated region
        $region29: #{region_target_loss.1} parent=27 // pred_check
          %p181 = pneg %p113
        $region30: #{region_target_loss.1} parent=27 // pred_check_branch
          %183 = sbr.rel (%p181) target = $region32
        $region31: #{region_target_loss.1} parent=27 // pred_region
          %s184 = sand.u32 %s103, 1
          %s185 = sand.u32 %s103, 1
          %s186 = smul.addr %s185, 80
          %s187 = scalar_lea.vmem [#allocation3], %s186
          %s188 = smul.u32 2, %s18
          %s189 = smul.addr %s188, 10
          %s190 = sadd.s32 %s19, %s189
          %s191 = smul.addr %s190, 8
          %s192 = scalar_lea.vmem %s3, %s191
          // Predicated region
          $region33: #{region_target_loss.1} parent=31 // pred_check
            _
          $region34: #{region_target_loss.1} parent=31 // pred_check_branch
            %194 = sbr.rel (0) target = $region36
          $region35: #{region_target_loss.1} parent=31 // pred_region
            // Predicated region
            $region37: #{region_target_loss.1} parent=35 // pred_check
              _
            $region38: #{region_target_loss.1} parent=35 // pred_check_branch
              %196 = sbr.rel (0) target = $region40
            $region39: #{region_target_loss.1} parent=35 // pred_region
              // Predicated region
              $region52: #{region_target_loss.1} parent=39 // pred_check
                _
              $region53: #{region_target_loss.1} parent=39 // pred_check_branch
                %230 = sbr.rel (0) target = $region55
              $region54: #{region_target_loss.1} parent=39 // pred_region
                loop: start=0, step=1, limit=1
                $region56: #{region_target_loss.1} parent=54 // loop_pre_header
                  _
                $region57: #{region_target_loss.1} parent=54 // loop_header
                  %s232 = sphi 0, %s236
                  %p233 = scmp.ge.s32.totalorder %s232, 1
                  %s237 = sphi %s192, %s192
                  %s238 = sphi %s187, %s187
                $region58: #{region_target_loss.1} parent=54 // loop_header_branch
                  %235 = sbr.rel (%p233) target = $region62
                $region59: #{region_target_loss.1} parent=54 // loop_body
                  %v239 = vld [vmem:[%s237] sm:$0xff]
                  %240 = vst [vmem:[%s238] sm:$0xff] %v239
                  %v241 = vld [vmem:[%s237 + $0x10] sm:$0xff]
                  %242 = vst [vmem:[%s238 + $0x8] sm:$0xff] %v241
                  %v243 = vld [vmem:[%s237 + $0x20] sm:$0xff]
                  %244 = vst [vmem:[%s238 + $0x10] sm:$0xff] %v243
                  %v245 = vld [vmem:[%s237 + $0x30] sm:$0xff]
                  %246 = vst [vmem:[%s238 + $0x18] sm:$0xff] %v245
                  %v247 = vld [vmem:[%s237 + $0x40] sm:$0xff]
                  %248 = vst [vmem:[%s238 + $0x20] sm:$0xff] %v247
                  %v249 = vld [vmem:[%s237 + $0x50] sm:$0xff]
                  %250 = vst [vmem:[%s238 + $0x28] sm:$0xff] %v249
                  %v251 = vld [vmem:[%s237 + $0x60] sm:$0xff]
                  %252 = vst [vmem:[%s238 + $0x30] sm:$0xff] %v251
                  %v253 = vld [vmem:[%s237 + $0x70] sm:$0xff]
                  %254 = vst [vmem:[%s238 + $0x38] sm:$0xff] %v253
                  %v255 = vld [vmem:[%s237 + $0x80] sm:$0xff]
                  %256 = vst [vmem:[%s238 + $0x40] sm:$0xff] %v255
                  %v257 = vld [vmem:[%s237 + $0x90] sm:$0xff]
                  %258 = vst [vmem:[%s238 + $0x48] sm:$0xff] %v257
                $region60: #{region_target_loss.1} parent=54 // loop_footer
                  %s236 = sadd.s32 1, %s232
                $region61: #{region_target_loss.1} parent=54 // loop_footer_branch
                  %231 = sbr.rel target = $region57
                $region62: #{region_target_loss.1} parent=54 // loop_exit
                  _
              $region55: #{region_target_loss.1} parent=39 // pred_fallthru
                _
              // Predicated region
              $region63: #{region_target_loss.1} parent=39 // pred_check
                _
              $region64: #{region_target_loss.1} parent=39 // pred_check_branch
                %260 = sbr.rel target = $region66
              $region65: #{region_target_loss.1} parent=39 // pred_region
                _
              $region66: #{region_target_loss.1} parent=39 // pred_fallthru
                _
            $region40: #{region_target_loss.1} parent=35 // pred_fallthru
              _
            // Predicated region
            $region41: #{region_target_loss.1} parent=35 // pred_check
              _
            $region42: #{region_target_loss.1} parent=35 // pred_check_branch
              %198 = sbr.rel target = $region44
            $region43: #{region_target_loss.1} parent=35 // pred_region
              %s200 = ssub.s32 256, 1
              loop: start=0, step=1, limit=1
              $region45: #{region_target_loss.1} parent=43 // loop_pre_header
                _
              $region46: #{region_target_loss.1} parent=43 // loop_header
                %s202 = sphi 0, %s206
                %p203 = scmp.ge.s32.totalorder %s202, 1
                %s207 = sphi %s192, %s192
                %s208 = sphi %s187, %s187
              $region47: #{region_target_loss.1} parent=43 // loop_header_branch
                %205 = sbr.rel (%p203) target = $region51
              $region48: #{region_target_loss.1} parent=43 // loop_body
                %v209 = vld [vmem:[%s207] sm:%s200]
                %210 = vst [vmem:[%s208] sm:%s200] %v209
                %v211 = vld [vmem:[%s207 + $0x10] sm:%s200]
                %212 = vst [vmem:[%s208 + $0x8] sm:%s200] %v211
                %v213 = vld [vmem:[%s207 + $0x20] sm:%s200]
                %214 = vst [vmem:[%s208 + $0x10] sm:%s200] %v213
                %v215 = vld [vmem:[%s207 + $0x30] sm:%s200]
                %216 = vst [vmem:[%s208 + $0x18] sm:%s200] %v215
                %v217 = vld [vmem:[%s207 + $0x40] sm:%s200]
                %218 = vst [vmem:[%s208 + $0x20] sm:%s200] %v217
                %v219 = vld [vmem:[%s207 + $0x50] sm:%s200]
                %220 = vst [vmem:[%s208 + $0x28] sm:%s200] %v219
                %v221 = vld [vmem:[%s207 + $0x60] sm:%s200]
                %222 = vst [vmem:[%s208 + $0x30] sm:%s200] %v221
                %v223 = vld [vmem:[%s207 + $0x70] sm:%s200]
                %224 = vst [vmem:[%s208 + $0x38] sm:%s200] %v223
                %v225 = vld [vmem:[%s207 + $0x80] sm:%s200]
                %226 = vst [vmem:[%s208 + $0x40] sm:%s200] %v225
                %v227 = vld [vmem:[%s207 + $0x90] sm:%s200]
                %228 = vst [vmem:[%s208 + $0x48] sm:%s200] %v227
              $region49: #{region_target_loss.1} parent=43 // loop_footer
                %s206 = sadd.s32 1, %s202
              $region50: #{region_target_loss.1} parent=43 // loop_footer_branch
                %201 = sbr.rel target = $region46
              $region51: #{region_target_loss.1} parent=43 // loop_exit
                _
            $region44: #{region_target_loss.1} parent=35 // pred_fallthru
              _
          $region36: #{region_target_loss.1} parent=31 // pred_fallthru
            _
          %261 = vnop
        $region32: #{region_target_loss.1} parent=27 // pred_fallthru
          _
      $region28: #{region_target_loss.1} parent=5 // pred_fallthru
        _
      %p262 = scmp.le.s32.totalorder 1, %s11
      %p263 = scmp.lt.s32.totalorder %s11, 3
      %p264 = pnand %p262, %p263
      %p265 = pneg %p264
      // Predicated region
      $region67: #{region_target_loss.1} parent=5 // pred_check
        _
      $region68: #{region_target_loss.1} parent=5 // pred_check_branch
        %267 = sbr.rel (%p264) target = $region70
      $region69: #{region_target_loss.1} parent=5 // pred_region
        %s268 = ssub.s32 %s11, 1
        %s269 = sand.u32 %s106, 1
        %s270 = sand.u32 %s106, 1
        %s271 = smul.addr %s270, 80
        %s272 = scalar_lea.vmem [#allocation3], %s271
        // Predicated region
        $region71: #{region_target_loss.1} parent=69 // pred_check
          %p273 = pneg %p119
        $region72: #{region_target_loss.1} parent=69 // pred_check_branch
          %275 = sbr.rel (%p273) target = $region74
        $region73: #{region_target_loss.1} parent=69 // pred_region
          _
        $region74: #{region_target_loss.1} parent=69 // pred_fallthru
          _
        %p276 = pneg %p44
        %p277 = pneg %p41
        %s278 = smul.u32 2, %s20
        %p279 = scmp.lt.s32.totalorder %s278, 1
        %s280 = scalar_select %p279, %s278, 1
        %s281 = smul.addr %s280, 8
        %s282 = scalar_lea.vmem %s1, %s281
        %p283 = pneg %p70
        %p284 = pneg %p67
        %p285 = pneg %p91
        %p286 = pneg %p88
        %s287 = sand.u32 %s106, 1
        %s288 = sand.u32 %s106, 1
        %s289 = smul.addr %s288, 80
        %s290 = scalar_lea.vmem [#allocation3], %s289
        %p291 = pneg %p119
        %p292 = pneg %p116
        %p293 = pneg %p147
        %p294 = pneg %p144
        %p295 = scmp.lt.s32.totalorder %s20, 0
        %s296 = scalar_select %p295, %s20, 0
        %p297 = scmp.lt.s32.totalorder %s21, 1
        %s298 = scalar_select %p297, %s21, 1
        %s299 = smul.addr %s296, 2
        %s300 = sadd.s32 %s298, %s299
        %s301 = smul.addr %s300, 8
        %s302 = scalar_lea.vmem %s4, %s301
        %s303 = smul.u32 2, %s20
        %p304 = scmp.lt.s32.totalorder %s303, 1
        %s305 = scalar_select %p304, %s303, 1
        %s306 = smul.addr %s305, 8
        %s307 = scalar_lea.vmem %s1, %s306
        %s308 = smul.u32 2, %s20
        %s309 = smul.u32 2, %s20
        %p310 = scmp.lt.s32.totalorder %s20, 0
        %s311 = scalar_select %p310, %s20, 0
        %p312 = scmp.lt.s32.totalorder %s21, 1
        %s313 = scalar_select %p312, %s21, 1
        %s314 = smul.addr %s311, 2
        %s315 = sadd.s32 %s313, %s314
        %s316 = smul.addr %s315, 8
        %s317 = scalar_lea.vmem %s4, %s316
        %v318 = vld [vmem:[%s272] sm:$0x1f]
        %v319 = vld [vmem:[%s272 + $0x8] sm:$0x1f]
        %v320 = vld [vmem:[%s272 + $0x10] sm:$0x1f]
        %v321 = vld [vmem:[%s272 + $0x18] sm:$0x1f]
        %v322 = vld [vmem:[%s272 + $0x20] sm:$0x1f]
        %v323 = vld [vmem:[%s272 + $0x28] sm:$0x1f]
        %v324 = vld [vmem:[%s272 + $0x30] sm:$0x1f]
        %v325 = vld [vmem:[%s272 + $0x38] sm:$0x1f]
        %v326 = vld [vmem:[%s272 + $0x40] sm:$0x1f]
        %v327 = vld [vmem:[%s272 + $0x48] sm:$0x1f]
        %v328 = vld [vmem:[%s2] sm:$0x1f]
        %v329 = vxor.u32 %v318, 2147483648
        %v330 = vxor.u32 %v323, 2147483648
        %v331 = vmul.f32 %v329, 1.442695
        %v332 = vpow.pop %v331
        %v333 = vmul.f32 %v330, 1.442695
        %v334 = vpow.pop %v333
        %v335 = vadd.f32 %v332, 1.0
        %v336 = vadd.f32 %v334, 1.0
        %v337 = vrcp.pop %v335
        %v338 = vmul.f32 %v335, %v337
        %v339 = vsub.f32 1.0, %v338
        %v340 = vmul.f32 %v337, %v339
        %v341 = vadd.f32 %v337, %v340
        %vm342 = vweird.f32 %v335
        %vm343 = vweird.f32 %v337
        %vm344 = vmor %vm342, %vm343
        %v345 = vsel %vm344, %v337, %v341
        %v346 = vand.u32 2147483647, %v335
        %vm347 = vcmp.eq.f32.partialorder %v346, 8.507059e+37
        %v348 = vand.u32 %v335, 2147483648
        %v349 = vor.u32 1.1754944e-38, %v348
        %v350 = vsel %vm347, %v349, %v345
        %v351 = vmul.f32 1.0, %v350
        %v352 = vrcp.pop %v336
        %v353 = vmul.f32 %v336, %v352
        %v354 = vsub.f32 1.0, %v353
        %v355 = vmul.f32 %v352, %v354
        %v356 = vadd.f32 %v352, %v355
        %vm357 = vweird.f32 %v336
        %vm358 = vweird.f32 %v352
        %vm359 = vmor %vm357, %vm358
        %v360 = vsel %vm359, %v352, %v356
        %v361 = vand.u32 2147483647, %v336
        %vm362 = vcmp.eq.f32.partialorder %v361, 8.507059e+37
        %v363 = vand.u32 %v336, 2147483648
        %v364 = vor.u32 1.1754944e-38, %v363
        %v365 = vsel %vm362, %v364, %v360
        %v366 = vmul.f32 1.0, %v365
        %v367 = vxor.u32 %v319, 2147483648
        %v368 = vxor.u32 %v324, 2147483648
        %v369 = vmul.f32 %v367, 1.442695
        %v370 = vpow.pop %v369
        %v371 = vmul.f32 %v368, 1.442695
        %v372 = vpow.pop %v371
        %v373 = vadd.f32 %v370, 1.0
        %v374 = vadd.f32 %v372, 1.0
        %v375 = vrcp.pop %v373
        %v376 = vmul.f32 %v373, %v375
        %v377 = vsub.f32 1.0, %v376
        %v378 = vmul.f32 %v375, %v377
        %v379 = vadd.f32 %v375, %v378
        %vm380 = vweird.f32 %v373
        %vm381 = vweird.f32 %v375
        %vm382 = vmor %vm380, %vm381
        %v383 = vsel %vm382, %v375, %v379
        %v384 = vand.u32 2147483647, %v373
        %vm385 = vcmp.eq.f32.partialorder %v384, 8.507059e+37
        %v386 = vand.u32 %v373, 2147483648
        %v387 = vor.u32 1.1754944e-38, %v386
        %v388 = vsel %vm385, %v387, %v383
        %v389 = vmul.f32 1.0, %v388
        %v390 = vrcp.pop %v374
        %v391 = vmul.f32 %v374, %v390
        %v392 = vsub.f32 1.0, %v391
        %v393 = vmul.f32 %v390, %v392
        %v394 = vadd.f32 %v390, %v393
        %vm395 = vweird.f32 %v374
        %vm396 = vweird.f32 %v390
        %vm397 = vmor %vm395, %vm396
        %v398 = vsel %vm397, %v390, %v394
        %v399 = vand.u32 2147483647, %v374
        %vm400 = vcmp.eq.f32.partialorder %v399, 8.507059e+37
        %v401 = vand.u32 %v374, 2147483648
        %v402 = vor.u32 1.1754944e-38, %v401
        %v403 = vsel %vm400, %v402, %v398
        %v404 = vmul.f32 1.0, %v403
        %v405 = vxor.u32 %v322, 2147483648
        %v406 = vxor.u32 %v327, 2147483648
        %v407 = vmul.f32 %v405, 1.442695
        %v408 = vpow.pop %v407
        %v409 = vmul.f32 %v406, 1.442695
        %v410 = vpow.pop %v409
        %v411 = vadd.f32 %v408, 1.0
        %v412 = vadd.f32 %v410, 1.0
        %v413 = vrcp.pop %v411
        %v414 = vmul.f32 %v411, %v413
        %v415 = vsub.f32 1.0, %v414
        %v416 = vmul.f32 %v413, %v415
        %v417 = vadd.f32 %v413, %v416
        %vm418 = vweird.f32 %v411
        %vm419 = vweird.f32 %v413
        %vm420 = vmor %vm418, %vm419
        %v421 = vsel %vm420, %v413, %v417
        %v422 = vand.u32 2147483647, %v411
        %vm423 = vcmp.eq.f32.partialorder %v422, 8.507059e+37
        %v424 = vand.u32 %v411, 2147483648
        %v425 = vor.u32 1.1754944e-38, %v424
        %v426 = vsel %vm423, %v425, %v421
        %v427 = vmul.f32 1.0, %v426
        %v428 = vrcp.pop %v412
        %v429 = vmul.f32 %v412, %v428
        %v430 = vsub.f32 1.0, %v429
        %v431 = vmul.f32 %v428, %v430
        %v432 = vadd.f32 %v428, %v431
        %vm433 = vweird.f32 %v412
        %vm434 = vweird.f32 %v428
        %vm435 = vmor %vm433, %vm434
        %v436 = vsel %vm435, %v428, %v432
        %v437 = vand.u32 2147483647, %v412
        %vm438 = vcmp.eq.f32.partialorder %v437, 8.507059e+37
        %v439 = vand.u32 %v412, 2147483648
        %v440 = vor.u32 1.1754944e-38, %v439
        %v441 = vsel %vm438, %v440, %v436
        %v442 = vmul.f32 1.0, %v441
        %444 = vset.pattern.permute.xlu0 0
        %445 = vperm.xlu0 %444, %v328
        %v446 = vpop.permute.xlu0 %445
        %v448 = vadd.f32 %v320, %v446
        %v449 = vadd.f32 %v325, %v446
        %v450 = vmul.f32 %v448, 1.442695
        %v451 = vpow.pop %v450
        %v452 = vmul.f32 %v449, 1.442695
        %v453 = vpow.pop %v452
        %454 = vset.pattern.permute.xlu0 1
        %455 = vperm.xlu0 %454, %v328
        %v456 = vpop.permute.xlu0 %455
        %v458 = vadd.f32 %v321, %v456
        %v459 = vadd.f32 %v326, %v456
        %v460 = vmul.f32 %v458, 1.442695
        %v461 = vpow.pop %v460
        %v462 = vmul.f32 %v459, 1.442695
        %v463 = vpow.pop %v462
        %v464 = vsub.f32 %v351, 0.5
        %v465 = vsub.f32 %v366, 0.5
        %v466 = vsub.f32 %v389, 0.5
        %v467 = vsub.f32 %v404, 0.5
        %v468 = vmul.f32 %v464, %v464
        %v469 = vmul.f32 %v465, %v465
        %vm470 = vcmask 1044480
        %v471 = vsel %vm470, %v468, 0.0
        %v472 = vsel %vm470, %v469, 0.0
        %v473 = vadd.f32 %v471, %v472
        %474 = vadd.xlane.f32.xlu0 %v473
        %v475 = vpop.xlane.xlu0 %474
        %v476 = vrot.slane %v475, 4
        %v477 = vadd.f32 %v475, %v476
        %v478 = vrot.slane %v477, 2
        %v479 = vadd.f32 %v477, %v478
        %v480 = vrot.slane %v479, 1
        %v481 = vadd.f32 %v479, %v480
        %s482 = vtos %v481
        %v483 = vmul.f32 %v466, %v466
        %v484 = vmul.f32 %v467, %v467
        %v485 = vsel %vm470, %v483, 0.0
        %v486 = vsel %vm470, %v484, 0.0
        %v487 = vadd.f32 %v485, %v486
        %488 = vadd.xlane.f32.xlu0 %v487
        %v489 = vpop.xlane.xlu0 %488
        %v490 = vrot.slane %v489, 4
        %v491 = vadd.f32 %v489, %v490
        %v492 = vrot.slane %v491, 2
        %v493 = vadd.f32 %v491, %v492
        %v494 = vrot.slane %v493, 1
        %v495 = vadd.f32 %v493, %v494
        %s496 = vtos %v495
        %s497 = sadd.f32 %s482, %s496
        %s498 = smul.f32 %s497, 0.01
        %v499 = vmul.f32 %v320, %v320
        %v500 = vmul.f32 %v325, %v325
        %v501 = vsel %vm470, %v499, 0.0
        %v502 = vsel %vm470, %v500, 0.0
        %v503 = vadd.f32 %v501, %v502
        %504 = vadd.xlane.f32.xlu0 %v503
        %v505 = vpop.xlane.xlu0 %504
        %v506 = vrot.slane %v505, 4
        %v507 = vadd.f32 %v505, %v506
        %v508 = vrot.slane %v507, 2
        %v509 = vadd.f32 %v507, %v508
        %v510 = vrot.slane %v509, 1
        %v511 = vadd.f32 %v509, %v510
        %s512 = vtos %v511
        %v513 = vmul.f32 %v321, %v321
        %v514 = vmul.f32 %v326, %v326
        %v515 = vsel %vm470, %v513, 0.0
        %v516 = vsel %vm470, %v514, 0.0
        %v517 = vadd.f32 %v515, %v516
        %518 = vadd.xlane.f32.xlu0 %v517
        %v519 = vpop.xlane.xlu0 %518
        %v520 = vrot.slane %v519, 4
        %v521 = vadd.f32 %v519, %v520
        %v522 = vrot.slane %v521, 2
        %v523 = vadd.f32 %v521, %v522
        %v524 = vrot.slane %v523, 1
        %v525 = vadd.f32 %v523, %v524
        %s526 = vtos %v525
        %s527 = sadd.f32 %s512, %s526
        %s528 = smul.f32 %s527, 0.01
        %v529 = vlaneseq
        %v530 = vand.u32 %v529, 127
        %s531 = smul.u32 %s21, 128
        %v532 = vstv %s531
        %v533 = vadd.s32 %v530, %v532
        %v534 = vcvt.s32.f32 %v533
        %v535 = vadd.f32 %v534, 0.5
        %v536 = vrcp.pop 16.0
        %v537 = vmul.f32 16.0, %v536
        %v538 = vsub.f32 1.0, %v537
        %v539 = vmul.f32 %v536, %v538
        %v540 = vadd.f32 %v536, %v539
        %vm541 = vweird.f32 %v536
        %v542 = vsel %vm541, %v536, %v540
        %v543 = vmul.f32 %v535, %v542
        %v544 = vfloor.f32 %v543
        %v545 = vmul.f32 %v544, 16.0
        %v546 = vsub.f32 %v534, %v545
        %v547 = vadd.f32 %v546, %v351
        %v548 = vadd.f32 %v546, %v366
        %v549 = vmul.f32 %v547, 0.0625
        %v550 = vmul.f32 %v548, 0.0625
        %v551 = vadd.f32 %v544, %v389
        %v552 = vadd.f32 %v544, %v404
        %v553 = vmul.f32 %v551, 0.0625
        %v554 = vmul.f32 %v552, 0.0625
        %v555 = vmul.f32 %v451, 0.5
        %v556 = vmul.f32 %v453, 0.5
        %v557 = vsub.f32 %v549, %v555
        %v558 = vsub.f32 %v550, %v556
        %v559 = vadd.f32 %v549, %v555
        %v560 = vadd.f32 %v550, %v556
        %v561 = vmul.f32 %v461, 0.5
        %v562 = vmul.f32 %v463, 0.5
        %v563 = vsub.f32 %v553, %v561
        %v564 = vsub.f32 %v554, %v562
        %v565 = vadd.f32 %v553, %v561
        %v566 = vadd.f32 %v554, %v562
        %v567 = vmul.f32 %v451, %v461
        %v568 = vmul.f32 %v453, %v463
        %s569 = sld [smem:[#allocation2 + %s20]]
        // While loop
        $region75: #{region_target_loss.1} parent=69 // loop_pre_header
          _
        $region76: #{region_target_loss.1} parent=69 // loop_header
          %s571 = sphi 0, %s573
          %p572 = scmp.ge.s32.totalorder %s571, %s569
          %v576 = vphi 0.0, %v657
          %v577 = vphi 0.0, %v658
        $region77: #{region_target_loss.1} parent=69 // loop_header_branch
          %575 = sbr.rel (%p572) target = $region81
        $region78: #{region_target_loss.1} parent=69 // loop_body
          %s578 = scalar_lea.vmem %s307, %s571
          %v579 = vld [vmem:[%s578] sm:$0x1]
          %v580 = vld [vmem:[%s578 + $0x8] sm:$0x1]
          %s582 = vtos %v579
          %v583 = vstv %s582
          %s586 = vtos %v580
          %v587 = vstv %s586
          %v589 = vmax.f32 %v557, %v583
          %v590 = vmax.f32 %v558, %v587
          %591 = vrot.lane.b32.xlu0 %v579, 127
          %v592 = vpop.permute.xlu0 %591
          %593 = vrot.lane.b32.xlu0 %v580, 127
          %v594 = vpop.permute.xlu0 %593
          %s595 = vtos %v592
          %v596 = vstv %s595
          %s598 = vtos %v594
          %v599 = vstv %s598
          %v601 = vmin.f32 %v559, %v596
          %v602 = vmin.f32 %v560, %v599
          %603 = vrot.lane.b32.xlu0 %v579, 126
          %v604 = vpop.permute.xlu0 %603
          %605 = vrot.lane.b32.xlu0 %v580, 126
          %v606 = vpop.permute.xlu0 %605
          %s607 = vtos %v604
          %v608 = vstv %s607
          %s610 = vtos %v606
          %v611 = vstv %s610
          %v613 = vmax.f32 %v563, %v608
          %v614 = vmax.f32 %v564, %v611
          %615 = vrot.lane.b32.xlu0 %v579, 125
          %v616 = vpop.permute.xlu0 %615
          %617 = vrot.lane.b32.xlu0 %v580, 125
          %v618 = vpop.permute.xlu0 %617
          %s619 = vtos %v616
          %v620 = vstv %s619
          %s622 = vtos %v618
          %v623 = vstv %s622
          %v625 = vmin.f32 %v565, %v620
          %v626 = vmin.f32 %v566, %v623
          %v627 = vsub.f32 %v601, %v589
          %v628 = vsub.f32 %v602, %v590
          %v629 = vmax.f32 %v627, 0.0
          %v630 = vmax.f32 %v628, 0.0
          %v631 = vsub.f32 %v625, %v613
          %v632 = vsub.f32 %v626, %v614
          %v633 = vmax.f32 %v631, 0.0
          %v634 = vmax.f32 %v632, 0.0
          %v635 = vmul.f32 %v629, %v633
          %v636 = vmul.f32 %v630, %v634
          %637 = vrot.lane.b32.xlu0 %v579, 124
          %v638 = vpop.permute.xlu0 %637
          %639 = vrot.lane.b32.xlu0 %v580, 124
          %v640 = vpop.permute.xlu0 %639
          %s641 = vtos %v638
          %v642 = vstv %s641
          %s644 = vtos %v640
          %v645 = vstv %s644
          %v647 = vadd.f32 %v567, %v642
          %v648 = vadd.f32 %v568, %v645
          %v649 = vsub.f32 %v647, %v635
          %v650 = vsub.f32 %v648, %v636
          %v651 = vmax.f32 %v649, 1e-10
          %v652 = vmax.f32 %v650, 1e-10
          %v653 = vrcp.pop %v651
          %v654 = vrcp.pop %v652
          %v655 = vmul.f32 %v635, %v653
          %v656 = vmul.f32 %v636, %v654
          %v657 = vmax.f32 %v576, %v655
          %v658 = vmax.f32 %v577, %v656
        $region79: #{region_target_loss.1} parent=69 // loop_footer
          %s573 = sadd.s32 %s571, 1
        $region80: #{region_target_loss.1} parent=69 // loop_footer_branch
          %570 = sbr.rel target = $region76
        $region81: #{region_target_loss.1} parent=69 // loop_exit
          _
        %vm659 = vcmp.gt.f32.partialorder %v576, 0.6
        %vm660 = vcmp.gt.f32.partialorder %v577, 0.6
        %v661 = vmul.f32 %v427, %v427
        %v662 = vmul.f32 %v442, %v442
        %v663 = vsel %vm659, 0.0, %v661
        %v664 = vsel %vm660, 0.0, %v662
        %v665 = vsel %vm470, %v663, 0.0
        %v666 = vsel %vm470, %v664, 0.0
        %v667 = vadd.f32 %v665, %v666
        %668 = vadd.xlane.f32.xlu0 %v667
        %v669 = vpop.xlane.xlu0 %668
        %v670 = vrot.slane %v669, 4
        %v671 = vadd.f32 %v669, %v670
        %v672 = vrot.slane %v671, 2
        %v673 = vadd.f32 %v671, %v672
        %v674 = vrot.slane %v673, 1
        %v675 = vadd.f32 %v673, %v674
        %s676 = vtos %v675
        %v677 = vlaneseq
        %v678 = vshrl.u32 %v677, 7
        %vm679 = vcmp.eq.s32.totalorder %v678, 0
        %v680 = vstv %s498
        %v681 = vsel %vm679, %v680, 0.0
        %vm682 = vcmp.eq.s32.totalorder %v678, 1
        %v683 = vstv %s528
        %v684 = vsel %vm682, %v683, %v681
        %vm685 = vcmp.eq.s32.totalorder %v678, 2
        %v686 = vstv %s676
        %v687 = vsel %vm685, %v686, %v684
        %688 = vst [vmem:[%s317] sm:$0xff] %v687
        %p689 = scmp.lt.s32.totalorder %s20, 0
        %s690 = scalar_select %p689, %s20, 0
        %p691 = scmp.lt.s32.totalorder %s21, 1
        %s692 = scalar_select %p691, %s21, 1
        %s693 = smul.addr %s690, 2
        %s694 = sadd.s32 %s692, %s693
        %s695 = smul.addr %s694, 8
        %s696 = scalar_lea.vmem %s4, %s695
        // Predicated region
        $region82: #{region_target_loss.1} parent=69 // pred_check
          %p697 = pneg %p144
        $region83: #{region_target_loss.1} parent=69 // pred_check_branch
          %699 = sbr.rel (%p697) target = $region85
        $region84: #{region_target_loss.1} parent=69 // pred_region
          _
        $region85: #{region_target_loss.1} parent=69 // pred_fallthru
          _
      $region70: #{region_target_loss.1} parent=5 // pred_fallthru
        _
      %p700 = scmp.le.s32.totalorder 2, %s11
      // Predicated region
      $region86: #{region_target_loss.1} parent=5 // pred_check
        %p701 = pneg %p700
      $region87: #{region_target_loss.1} parent=5 // pred_check_branch
        %703 = sbr.rel (%p701) target = $region89
      $region88: #{region_target_loss.1} parent=5 // pred_region
        %s704 = ssub.s32 %s11, 2
        // Predicated region
        $region90: #{region_target_loss.1} parent=88 // pred_check
          %p705 = pneg %p150
        $region91: #{region_target_loss.1} parent=88 // pred_check_branch
          %707 = sbr.rel (%p705) target = $region93
        $region92: #{region_target_loss.1} parent=88 // pred_region
          %p708 = scmp.lt.s32.totalorder %s22, 0
          %s709 = scalar_select %p708, %s22, 0
          %p710 = scmp.lt.s32.totalorder %s23, 1
          %s711 = scalar_select %p710, %s23, 1
          %s712 = smul.addr %s709, 2
          %s713 = sadd.s32 %s711, %s712
          %s714 = smul.addr %s713, 8
          %s715 = scalar_lea.vmem %s4, %s714
        $region93: #{region_target_loss.1} parent=88 // pred_fallthru
          _
      $region89: #{region_target_loss.1} parent=5 // pred_fallthru
        _
    $region6: #{region_target_loss.1} parent=1 // loop_footer
      %s15 = sadd.s32 1, %s11
    $region7: #{region_target_loss.1} parent=1 // loop_footer_branch
      %10 = sbr.rel target = $region3
    $region8: #{region_target_loss.1} parent=1 // loop_exit
      _

</llo_original>
